<compile_context>
chip_gen: v7x
topology: tpu7x:2x2x1
jax: 0.10.0
libtpu: 0.0.40
codegen_flags: <defaults>
</compile_context>

<pallas_src>
import functools

import jax
import jax.numpy as jnp
from jax.experimental import pallas as pl
from jax.experimental.pallas import tpu as pltpu

EPS = 1e-5
N_HIDDEN = 5  # number of Linear+ReLU+BatchNorm1d blocks before the final Linear


def mlp_kernel(x_ref, w_ref, v_ref, o_ref):
    """x_ref: (B, W) padded input; w_ref: (6, W, W) padded weights;
    v_ref: (16, W) rows 0..5 = biases (final bias padded), 6..10 = gammas,
    11..15 = betas; o_ref: (B, W) (real outputs in the first 2 lanes)."""
    B = x_ref.shape[0]
    inv_b = jnp.float32(1.0 / B)
    v = v_ref[...]                                    # (16, W), one small load

    h = x_ref[...].astype(jnp.float32)
    for layer in range(N_HIDDEN):
        w = w_ref[layer]                              # (W, W) static slice
        b = v[layer:layer + 1, :]                     # (1, W)
        g = v[N_HIDDEN + 1 + layer:N_HIDDEN + 2 + layer, :]
        beta = v[2 * N_HIDDEN + 1 + layer:2 * N_HIDDEN + 2 + layer, :]

        # Linear + ReLU
        h = jnp.dot(h, w, preferred_element_type=jnp.float32) + b
        h = jnp.maximum(h, 0.0)

        # BatchNorm1d (training-mode stats), single pass over h
        mean = jnp.sum(h, axis=0, keepdims=True) * inv_b
        msq = jnp.sum(h * h, axis=0, keepdims=True) * inv_b
        var = msq - mean * mean                       # biased variance
        scale = g * jax.lax.rsqrt(var + EPS)          # rsqrt -> EUP slot
        shift = beta - mean * scale
        h = h * scale + shift                         # fused 2-op scale/shift

    # Final Linear (padded to width W; columns >= 2 are exactly zero)
    out = (jnp.dot(h, w_ref[N_HIDDEN], preferred_element_type=jnp.float32)
           + v[N_HIDDEN:N_HIDDEN + 1, :])
    o_ref[...] = out.astype(o_ref.dtype)


def pack_params(params, width):
    """Pack the 22 per-layer arrays into W:(6,width,width) and V:(16,width)."""
    ws, bs, gs, betas = [], [], [], []
    idx = 0
    for layer in range(N_HIDDEN + 1):
        w, b = params[idx], params[idx + 1]
        idx += 2
        ws.append(jnp.zeros((width, width), jnp.float32)
                  .at[:w.shape[0], :w.shape[1]].set(w))
        bs.append(jnp.zeros((width,), jnp.float32).at[:b.shape[1]].set(b[0]))
        if layer < N_HIDDEN:
            g, be = params[idx], params[idx + 1]
            idx += 2
            gs.append(jnp.zeros((width,), jnp.float32).at[:g.shape[1]].set(g[0]))
            betas.append(jnp.zeros((width,), jnp.float32).at[:be.shape[1]].set(be[0]))
    W = jnp.stack(ws)               # (6, width, width)
    V = jnp.stack(bs + gs + betas)  # (16, width)
    return W, V


@jax.jit
def mlp_forward(x, params):
    """x: (B, 8) float32. params: flat list of 22 arrays (see init_params)."""
    B, in_dim = x.shape
    # Collect layer widths (static shapes under jit).
    dims, idx = [in_dim], 0
    for layer in range(N_HIDDEN + 1):
        dims.append(params[idx].shape[1])
        idx += 4 if layer < N_HIDDEN else 2
    width = max(dims)
    out_dim = dims[-1]

    W, V = pack_params(params, width)
    x_pad = jnp.zeros((B, width), jnp.float32).at[:, :in_dim].set(x)

    vmem = pl.BlockSpec(memory_space=pltpu.MemorySpace.VMEM)
    out = pl.pallas_call(
        mlp_kernel,
        out_shape=jax.ShapeDtypeStruct((B, width), jnp.float32),
        in_specs=[vmem, vmem, vmem],
        out_specs=vmem,
    )(x_pad, W, V)
    return out[:, :out_dim]


def init_params(key, neurons):
    """Deterministic parameter init. Weights stored as (in, out)."""
    dims = [8] + list(neurons) + [2]
    params = []
    keys = jax.random.split(key, len(dims) - 1)
    for i in range(len(dims) - 1):
        fan_in, fan_out = dims[i], dims[i + 1]
        w = (jax.random.normal(keys[i], (fan_in, fan_out), jnp.float32)
             * (1.0 / jnp.sqrt(fan_in)))
        b = jnp.zeros((1, fan_out), jnp.float32)
        params.append(w)
        params.append(b)
        if i < len(neurons):  # BN follows every layer except the last Linear
            params.append(jnp.ones((1, fan_out), jnp.float32))   # gamma
            params.append(jnp.zeros((1, fan_out), jnp.float32))  # beta
    return params


def mlp_reference(x, params):
    """Pure-JAX reference (two-pass BN stats) for correctness check."""
    h = x
    idx = 0
    for layer in range(6):
        w, b = params[idx], params[idx + 1]
        idx += 2
        h = h @ w + b
        if layer < 5:
            g, beta = params[idx], params[idx + 1]
            idx += 2
            h = jnp.maximum(h, 0.0)
            mean = jnp.mean(h, axis=0, keepdims=True)
            var = jnp.mean((h - mean) ** 2, axis=0, keepdims=True)
            h = (h - mean) * jax.lax.rsqrt(var + EPS) * g + beta
    return h


if __name__ == "__main__":
    neurons = [32, 32, 32, 32, 32]
    batch = 8

    key = jax.random.PRNGKey(0)
    k_x, k_p = jax.random.split(key)
    x = jax.random.normal(k_x, (batch, 8), jnp.float32)
    params = init_params(k_p, neurons)

    out = mlp_forward(x, params)
    out = jax.block_until_ready(out)

    ref = mlp_reference(x, params)
    assert out.shape == (batch, 2), out.shape
    assert jnp.allclose(out, ref, atol=1e-4, rtol=1e-4), (
        float(jnp.max(jnp.abs(out - ref))))

    print("KERNEL_OK")
</pallas_src>

<mosaic_0001>
module attributes {stable_mosaic.version = 11 : i64} {
  func.func @mlp_kernel(%arg0: memref<8x32xf32, #tpu.memory_space<vmem>>, %arg1: memref<6x32x32xf32, #tpu.memory_space<vmem>>, %arg2: memref<16x32xf32, #tpu.memory_space<vmem>>, %arg3: memref<8x32xf32, #tpu.memory_space<vmem>>) attributes {dimension_semantics = [], scalar_prefetch = 0 : i64, scratch_operands = 0 : i64, tpu.core_type = #tpu.core_type<tc>} {
    %c0 = arith.constant 0 : index
    %c0_0 = arith.constant 0 : index
    %0 = vector.load %arg2[%c0, %c0_0] : memref<16x32xf32, #tpu.memory_space<vmem>>, vector<16x32xf32>
    %c0_1 = arith.constant 0 : index
    %c0_2 = arith.constant 0 : index
    %1 = vector.load %arg0[%c0_1, %c0_2] : memref<8x32xf32, #tpu.memory_space<vmem>>, vector<8x32xf32>
    %c0_3 = arith.constant 0 : index
    %c0_4 = arith.constant 0 : index
    %c0_5 = arith.constant 0 : index
    %2 = vector.load %arg1[%c0_3, %c0_4, %c0_5] : memref<6x32x32xf32, #tpu.memory_space<vmem>>, vector<1x32x32xf32>
    %3 = vector.shape_cast %2 : vector<1x32x32xf32> to vector<32x32xf32>
    %4 = vector.extract_strided_slice %0 {offsets = [0, 0], sizes = [1, 32], strides = [1, 1]} : vector<16x32xf32> to vector<1x32xf32>
    %5 = vector.extract_strided_slice %0 {offsets = [6, 0], sizes = [1, 32], strides = [1, 1]} : vector<16x32xf32> to vector<1x32xf32>
    %6 = vector.extract_strided_slice %0 {offsets = [11, 0], sizes = [1, 32], strides = [1, 1]} : vector<16x32xf32> to vector<1x32xf32>
    %cst = arith.constant dense<0.000000e+00> : vector<8x32xf32>
    %7 = tpu.matmul %1, %3, %cst {dimension_numbers = #tpu.dot_dimension_numbers<[1], [0], [0], [1], [0, 0, 1, 1], [], []>} : vector<8x32xf32>, vector<32x32xf32>, vector<8x32xf32> -> vector<8x32xf32>
    %8 = vector.broadcast %4 : vector<1x32xf32> to vector<8x32xf32>
    %9 = arith.addf %7, %8 : vector<8x32xf32>
    %cst_6 = arith.constant 0.000000e+00 : f32
    %10 = vector.broadcast %cst_6 : f32 to vector<8x32xf32>
    %11 = arith.maximumf %9, %10 : vector<8x32xf32>
    %cst_7 = arith.constant dense<0.000000e+00> : vector<32xf32>
    %12 = vector.multi_reduction <add>, %11, %cst_7 [0] : vector<8x32xf32> to vector<32xf32>
    %13 = vector.shape_cast %12 : vector<32xf32> to vector<1x32xf32>
    %cst_8 = arith.constant 1.250000e-01 : f32
    %14 = vector.broadcast %cst_8 : f32 to vector<1x32xf32>
    %15 = arith.mulf %13, %14 : vector<1x32xf32>
    %16 = arith.mulf %11, %11 : vector<8x32xf32>
    %cst_9 = arith.constant dense<0.000000e+00> : vector<32xf32>
    %17 = vector.multi_reduction <add>, %16, %cst_9 [0] : vector<8x32xf32> to vector<32xf32>
    %18 = vector.shape_cast %17 : vector<32xf32> to vector<1x32xf32>
    %cst_10 = arith.constant 1.250000e-01 : f32
    %19 = vector.broadcast %cst_10 : f32 to vector<1x32xf32>
    %20 = arith.mulf %18, %19 : vector<1x32xf32>
    %21 = arith.mulf %15, %15 : vector<1x32xf32>
    %22 = arith.subf %20, %21 : vector<1x32xf32>
    %cst_11 = arith.constant 9.99999974E-6 : f32
    %23 = vector.broadcast %cst_11 : f32 to vector<1x32xf32>
    %24 = arith.addf %22, %23 : vector<1x32xf32>
    %25 = math.rsqrt %24 : vector<1x32xf32>
    %26 = arith.mulf %5, %25 : vector<1x32xf32>
    %27 = arith.mulf %15, %26 : vector<1x32xf32>
    %28 = arith.subf %6, %27 : vector<1x32xf32>
    %29 = vector.broadcast %26 : vector<1x32xf32> to vector<8x32xf32>
    %30 = arith.mulf %11, %29 : vector<8x32xf32>
    %31 = vector.broadcast %28 : vector<1x32xf32> to vector<8x32xf32>
    %32 = arith.addf %30, %31 : vector<8x32xf32>
    %c1 = arith.constant 1 : index
    %c0_12 = arith.constant 0 : index
    %c0_13 = arith.constant 0 : index
    %33 = vector.load %arg1[%c1, %c0_12, %c0_13] : memref<6x32x32xf32, #tpu.memory_space<vmem>>, vector<1x32x32xf32>
    %34 = vector.shape_cast %33 : vector<1x32x32xf32> to vector<32x32xf32>
    %35 = vector.extract_strided_slice %0 {offsets = [1, 0], sizes = [1, 32], strides = [1, 1]} : vector<16x32xf32> to vector<1x32xf32>
    %36 = vector.extract_strided_slice %0 {offsets = [7, 0], sizes = [1, 32], strides = [1, 1]} : vector<16x32xf32> to vector<1x32xf32>
    %37 = vector.extract_strided_slice %0 {offsets = [12, 0], sizes = [1, 32], strides = [1, 1]} : vector<16x32xf32> to vector<1x32xf32>
    %cst_14 = arith.constant dense<0.000000e+00> : vector<8x32xf32>
    %38 = tpu.matmul %32, %34, %cst_14 {dimension_numbers = #tpu.dot_dimension_numbers<[1], [0], [0], [1], [0, 0, 1, 1], [], []>} : vector<8x32xf32>, vector<32x32xf32>, vector<8x32xf32> -> vector<8x32xf32>
    %39 = vector.broadcast %35 : vector<1x32xf32> to vector<8x32xf32>
    %40 = arith.addf %38, %39 : vector<8x32xf32>
    %cst_15 = arith.constant 0.000000e+00 : f32
    %41 = vector.broadcast %cst_15 : f32 to vector<8x32xf32>
    %42 = arith.maximumf %40, %41 : vector<8x32xf32>
    %cst_16 = arith.constant dense<0.000000e+00> : vector<32xf32>
    %43 = vector.multi_reduction <add>, %42, %cst_16 [0] : vector<8x32xf32> to vector<32xf32>
    %44 = vector.shape_cast %43 : vector<32xf32> to vector<1x32xf32>
    %cst_17 = arith.constant 1.250000e-01 : f32
    %45 = vector.broadcast %cst_17 : f32 to vector<1x32xf32>
    %46 = arith.mulf %44, %45 : vector<1x32xf32>
    %47 = arith.mulf %42, %42 : vector<8x32xf32>
    %cst_18 = arith.constant dense<0.000000e+00> : vector<32xf32>
    %48 = vector.multi_reduction <add>, %47, %cst_18 [0] : vector<8x32xf32> to vector<32xf32>
    %49 = vector.shape_cast %48 : vector<32xf32> to vector<1x32xf32>
    %cst_19 = arith.constant 1.250000e-01 : f32
    %50 = vector.broadcast %cst_19 : f32 to vector<1x32xf32>
    %51 = arith.mulf %49, %50 : vector<1x32xf32>
    %52 = arith.mulf %46, %46 : vector<1x32xf32>
    %53 = arith.subf %51, %52 : vector<1x32xf32>
    %cst_20 = arith.constant 9.99999974E-6 : f32
    %54 = vector.broadcast %cst_20 : f32 to vector<1x32xf32>
    %55 = arith.addf %53, %54 : vector<1x32xf32>
    %56 = math.rsqrt %55 : vector<1x32xf32>
    %57 = arith.mulf %36, %56 : vector<1x32xf32>
    %58 = arith.mulf %46, %57 : vector<1x32xf32>
    %59 = arith.subf %37, %58 : vector<1x32xf32>
    %60 = vector.broadcast %57 : vector<1x32xf32> to vector<8x32xf32>
    %61 = arith.mulf %42, %60 : vector<8x32xf32>
    %62 = vector.broadcast %59 : vector<1x32xf32> to vector<8x32xf32>
    %63 = arith.addf %61, %62 : vector<8x32xf32>
    %c2 = arith.constant 2 : index
    %c0_21 = arith.constant 0 : index
    %c0_22 = arith.constant 0 : index
    %64 = vector.load %arg1[%c2, %c0_21, %c0_22] : memref<6x32x32xf32, #tpu.memory_space<vmem>>, vector<1x32x32xf32>
    %65 = vector.shape_cast %64 : vector<1x32x32xf32> to vector<32x32xf32>
    %66 = vector.extract_strided_slice %0 {offsets = [2, 0], sizes = [1, 32], strides = [1, 1]} : vector<16x32xf32> to vector<1x32xf32>
    %67 = vector.extract_strided_slice %0 {offsets = [8, 0], sizes = [1, 32], strides = [1, 1]} : vector<16x32xf32> to vector<1x32xf32>
    %68 = vector.extract_strided_slice %0 {offsets = [13, 0], sizes = [1, 32], strides = [1, 1]} : vector<16x32xf32> to vector<1x32xf32>
    %cst_23 = arith.constant dense<0.000000e+00> : vector<8x32xf32>
    %69 = tpu.matmul %63, %65, %cst_23 {dimension_numbers = #tpu.dot_dimension_numbers<[1], [0], [0], [1], [0, 0, 1, 1], [], []>} : vector<8x32xf32>, vector<32x32xf32>, vector<8x32xf32> -> vector<8x32xf32>
    %70 = vector.broadcast %66 : vector<1x32xf32> to vector<8x32xf32>
    %71 = arith.addf %69, %70 : vector<8x32xf32>
    %cst_24 = arith.constant 0.000000e+00 : f32
    %72 = vector.broadcast %cst_24 : f32 to vector<8x32xf32>
    %73 = arith.maximumf %71, %72 : vector<8x32xf32>
    %cst_25 = arith.constant dense<0.000000e+00> : vector<32xf32>
    %74 = vector.multi_reduction <add>, %73, %cst_25 [0] : vector<8x32xf32> to vector<32xf32>
    %75 = vector.shape_cast %74 : vector<32xf32> to vector<1x32xf32>
    %cst_26 = arith.constant 1.250000e-01 : f32
    %76 = vector.broadcast %cst_26 : f32 to vector<1x32xf32>
    %77 = arith.mulf %75, %76 : vector<1x32xf32>
    %78 = arith.mulf %73, %73 : vector<8x32xf32>
    %cst_27 = arith.constant dense<0.000000e+00> : vector<32xf32>
    %79 = vector.multi_reduction <add>, %78, %cst_27 [0] : vector<8x32xf32> to vector<32xf32>
    %80 = vector.shape_cast %79 : vector<32xf32> to vector<1x32xf32>
    %cst_28 = arith.constant 1.250000e-01 : f32
    %81 = vector.broadcast %cst_28 : f32 to vector<1x32xf32>
    %82 = arith.mulf %80, %81 : vector<1x32xf32>
    %83 = arith.mulf %77, %77 : vector<1x32xf32>
    %84 = arith.subf %82, %83 : vector<1x32xf32>
    %cst_29 = arith.constant 9.99999974E-6 : f32
    %85 = vector.broadcast %cst_29 : f32 to vector<1x32xf32>
    %86 = arith.addf %84, %85 : vector<1x32xf32>
    %87 = math.rsqrt %86 : vector<1x32xf32>
    %88 = arith.mulf %67, %87 : vector<1x32xf32>
    %89 = arith.mulf %77, %88 : vector<1x32xf32>
    %90 = arith.subf %68, %89 : vector<1x32xf32>
    %91 = vector.broadcast %88 : vector<1x32xf32> to vector<8x32xf32>
    %92 = arith.mulf %73, %91 : vector<8x32xf32>
    %93 = vector.broadcast %90 : vector<1x32xf32> to vector<8x32xf32>
    %94 = arith.addf %92, %93 : vector<8x32xf32>
    %c3 = arith.constant 3 : index
    %c0_30 = arith.constant 0 : index
    %c0_31 = arith.constant 0 : index
    %95 = vector.load %arg1[%c3, %c0_30, %c0_31] : memref<6x32x32xf32, #tpu.memory_space<vmem>>, vector<1x32x32xf32>
    %96 = vector.shape_cast %95 : vector<1x32x32xf32> to vector<32x32xf32>
    %97 = vector.extract_strided_slice %0 {offsets = [3, 0], sizes = [1, 32], strides = [1, 1]} : vector<16x32xf32> to vector<1x32xf32>
    %98 = vector.extract_strided_slice %0 {offsets = [9, 0], sizes = [1, 32], strides = [1, 1]} : vector<16x32xf32> to vector<1x32xf32>
    %99 = vector.extract_strided_slice %0 {offsets = [14, 0], sizes = [1, 32], strides = [1, 1]} : vector<16x32xf32> to vector<1x32xf32>
    %cst_32 = arith.constant dense<0.000000e+00> : vector<8x32xf32>
    %100 = tpu.matmul %94, %96, %cst_32 {dimension_numbers = #tpu.dot_dimension_numbers<[1], [0], [0], [1], [0, 0, 1, 1], [], []>} : vector<8x32xf32>, vector<32x32xf32>, vector<8x32xf32> -> vector<8x32xf32>
    %101 = vector.broadcast %97 : vector<1x32xf32> to vector<8x32xf32>
    %102 = arith.addf %100, %101 : vector<8x32xf32>
    %cst_33 = arith.constant 0.000000e+00 : f32
    %103 = vector.broadcast %cst_33 : f32 to vector<8x32xf32>
    %104 = arith.maximumf %102, %103 : vector<8x32xf32>
    %cst_34 = arith.constant dense<0.000000e+00> : vector<32xf32>
    %105 = vector.multi_reduction <add>, %104, %cst_34 [0] : vector<8x32xf32> to vector<32xf32>
    %106 = vector.shape_cast %105 : vector<32xf32> to vector<1x32xf32>
    %cst_35 = arith.constant 1.250000e-01 : f32
    %107 = vector.broadcast %cst_35 : f32 to vector<1x32xf32>
    %108 = arith.mulf %106, %107 : vector<1x32xf32>
    %109 = arith.mulf %104, %104 : vector<8x32xf32>
    %cst_36 = arith.constant dense<0.000000e+00> : vector<32xf32>
    %110 = vector.multi_reduction <add>, %109, %cst_36 [0] : vector<8x32xf32> to vector<32xf32>
    %111 = vector.shape_cast %110 : vector<32xf32> to vector<1x32xf32>
    %cst_37 = arith.constant 1.250000e-01 : f32
    %112 = vector.broadcast %cst_37 : f32 to vector<1x32xf32>
    %113 = arith.mulf %111, %112 : vector<1x32xf32>
    %114 = arith.mulf %108, %108 : vector<1x32xf32>
    %115 = arith.subf %113, %114 : vector<1x32xf32>
    %cst_38 = arith.constant 9.99999974E-6 : f32
    %116 = vector.broadcast %cst_38 : f32 to vector<1x32xf32>
    %117 = arith.addf %115, %116 : vector<1x32xf32>
    %118 = math.rsqrt %117 : vector<1x32xf32>
    %119 = arith.mulf %98, %118 : vector<1x32xf32>
    %120 = arith.mulf %108, %119 : vector<1x32xf32>
    %121 = arith.subf %99, %120 : vector<1x32xf32>
    %122 = vector.broadcast %119 : vector<1x32xf32> to vector<8x32xf32>
    %123 = arith.mulf %104, %122 : vector<8x32xf32>
    %124 = vector.broadcast %121 : vector<1x32xf32> to vector<8x32xf32>
    %125 = arith.addf %123, %124 : vector<8x32xf32>
    %c4 = arith.constant 4 : index
    %c0_39 = arith.constant 0 : index
    %c0_40 = arith.constant 0 : index
    %126 = vector.load %arg1[%c4, %c0_39, %c0_40] : memref<6x32x32xf32, #tpu.memory_space<vmem>>, vector<1x32x32xf32>
    %127 = vector.shape_cast %126 : vector<1x32x32xf32> to vector<32x32xf32>
    %128 = vector.extract_strided_slice %0 {offsets = [4, 0], sizes = [1, 32], strides = [1, 1]} : vector<16x32xf32> to vector<1x32xf32>
    %129 = vector.extract_strided_slice %0 {offsets = [10, 0], sizes = [1, 32], strides = [1, 1]} : vector<16x32xf32> to vector<1x32xf32>
    %130 = vector.extract_strided_slice %0 {offsets = [15, 0], sizes = [1, 32], strides = [1, 1]} : vector<16x32xf32> to vector<1x32xf32>
    %cst_41 = arith.constant dense<0.000000e+00> : vector<8x32xf32>
    %131 = tpu.matmul %125, %127, %cst_41 {dimension_numbers = #tpu.dot_dimension_numbers<[1], [0], [0], [1], [0, 0, 1, 1], [], []>} : vector<8x32xf32>, vector<32x32xf32>, vector<8x32xf32> -> vector<8x32xf32>
    %132 = vector.broadcast %128 : vector<1x32xf32> to vector<8x32xf32>
    %133 = arith.addf %131, %132 : vector<8x32xf32>
    %cst_42 = arith.constant 0.000000e+00 : f32
    %134 = vector.broadcast %cst_42 : f32 to vector<8x32xf32>
    %135 = arith.maximumf %133, %134 : vector<8x32xf32>
    %cst_43 = arith.constant dense<0.000000e+00> : vector<32xf32>
    %136 = vector.multi_reduction <add>, %135, %cst_43 [0] : vector<8x32xf32> to vector<32xf32>
    %137 = vector.shape_cast %136 : vector<32xf32> to vector<1x32xf32>
    %cst_44 = arith.constant 1.250000e-01 : f32
    %138 = vector.broadcast %cst_44 : f32 to vector<1x32xf32>
    %139 = arith.mulf %137, %138 : vector<1x32xf32>
    %140 = arith.mulf %135, %135 : vector<8x32xf32>
    %cst_45 = arith.constant dense<0.000000e+00> : vector<32xf32>
    %141 = vector.multi_reduction <add>, %140, %cst_45 [0] : vector<8x32xf32> to vector<32xf32>
    %142 = vector.shape_cast %141 : vector<32xf32> to vector<1x32xf32>
    %cst_46 = arith.constant 1.250000e-01 : f32
    %143 = vector.broadcast %cst_46 : f32 to vector<1x32xf32>
    %144 = arith.mulf %142, %143 : vector<1x32xf32>
    %145 = arith.mulf %139, %139 : vector<1x32xf32>
    %146 = arith.subf %144, %145 : vector<1x32xf32>
    %cst_47 = arith.constant 9.99999974E-6 : f32
    %147 = vector.broadcast %cst_47 : f32 to vector<1x32xf32>
    %148 = arith.addf %146, %147 : vector<1x32xf32>
    %149 = math.rsqrt %148 : vector<1x32xf32>
    %150 = arith.mulf %129, %149 : vector<1x32xf32>
    %151 = arith.mulf %139, %150 : vector<1x32xf32>
    %152 = arith.subf %130, %151 : vector<1x32xf32>
    %153 = vector.broadcast %150 : vector<1x32xf32> to vector<8x32xf32>
    %154 = arith.mulf %135, %153 : vector<8x32xf32>
    %155 = vector.broadcast %152 : vector<1x32xf32> to vector<8x32xf32>
    %156 = arith.addf %154, %155 : vector<8x32xf32>
    %c5 = arith.constant 5 : index
    %c0_48 = arith.constant 0 : index
    %c0_49 = arith.constant 0 : index
    %157 = vector.load %arg1[%c5, %c0_48, %c0_49] : memref<6x32x32xf32, #tpu.memory_space<vmem>>, vector<1x32x32xf32>
    %158 = vector.shape_cast %157 : vector<1x32x32xf32> to vector<32x32xf32>
    %cst_50 = arith.constant dense<0.000000e+00> : vector<8x32xf32>
    %159 = tpu.matmul %156, %158, %cst_50 {dimension_numbers = #tpu.dot_dimension_numbers<[1], [0], [0], [1], [0, 0, 1, 1], [], []>} : vector<8x32xf32>, vector<32x32xf32>, vector<8x32xf32> -> vector<8x32xf32>
    %160 = vector.extract_strided_slice %0 {offsets = [5, 0], sizes = [1, 32], strides = [1, 1]} : vector<16x32xf32> to vector<1x32xf32>
    %161 = vector.broadcast %160 : vector<1x32xf32> to vector<8x32xf32>
    %162 = arith.addf %159, %161 : vector<8x32xf32>
    %c0_51 = arith.constant 0 : index
    %c0_52 = arith.constant 0 : index
    %163 = vector.load %arg3[%c0_51, %c0_52] : memref<8x32xf32, #tpu.memory_space<vmem>>, vector<8x32xf32>
    tpu.vector_store %arg3[%c0_51, %c0_52], %162 {strides = array<i32>} : memref<8x32xf32, #tpu.memory_space<vmem>>, vector<8x32xf32>,
    return
  }
}

</mosaic_0001>

<llo_original>
// kernel: mlp_forward.1
$region0: #{mlp_forward.1}
  #allocation0 [shape = 'u32[]', space=smem, size = 0x4, offset = 0x4, fixed_abs, tag = 'smem constant byte address 0x4 - core index']
  #allocation1 [shape = 'u32[144,128]{1,0:T(1,128)}', space=vmem, size = 0x12000, scoped, tag = 'internal scratch']
  %s0 = inlined_call_operand.vmem [shape: f32[8,32], index: 0, kind: input, shape index: {}]
  %s1 = inlined_call_operand.vmem [shape: f32[6,32,32], index: 1, kind: input, shape index: {}]
  %s2 = inlined_call_operand.vmem [shape: f32[16,32], index: 2, kind: input, shape index: {}]
  %s3 = inlined_call_operand.vmem [shape: f32[8,32], index: 3, kind: output, shape index: {}]
  %s4 = sld [smem:[#allocation0]]
  $region22: #{mlp_forward.1} parent=0
    _
  %s6 = ssub.s32 1, %s4
  %s7 = scalar_select 0, %s6, %s4
  // Predicated region
  $region2: #{mlp_forward.1} parent=0 // pred_check
    _
  $region3: #{mlp_forward.1} parent=0 // pred_check_branch
    %9 = sbr.rel (0) target = $region5
  $region4: #{mlp_forward.1} parent=0 // pred_region
    _
  $region5: #{mlp_forward.1} parent=0 // pred_fallthru
    _
  // Predicated region
  $region6: #{mlp_forward.1} parent=0 // pred_check
    _
  $region7: #{mlp_forward.1} parent=0 // pred_check_branch
    %11 = sbr.rel (0) target = $region9
  $region8: #{mlp_forward.1} parent=0 // pred_region
    _
  $region9: #{mlp_forward.1} parent=0 // pred_fallthru
    _
  // Predicated region
  $region10: #{mlp_forward.1} parent=0 // pred_check
    _
  $region11: #{mlp_forward.1} parent=0 // pred_check_branch
    %13 = sbr.rel (0) target = $region13
  $region12: #{mlp_forward.1} parent=0 // pred_region
    _
  $region13: #{mlp_forward.1} parent=0 // pred_fallthru
    _
  %v14 = vld [vmem:[%s2] sm:$0xff]
  %v15 = vld [vmem:[%s2 + $0x8] sm:$0xff]
  %v16 = vld [vmem:[%s0] sm:$0xff]
  %v17 = vld [vmem:[%s1] sm:$0xff]
  %v18 = vld [vmem:[%s1 + $0x8] sm:$0xff]
  %v19 = vld [vmem:[%s1 + $0x10] sm:$0xff]
  %v20 = vld [vmem:[%s1 + $0x18] sm:$0xff]
  %v21 = vlaneseq
  %v22 = vshrl.u32 %v21, 7
  %v23 = vsub.s32 0, %v22
  %v24 = vrot.slane %v14, %v23
  %vm25 = vcmask 261120
  %v27 = vsel %vm25, %v16, 0
  %29 = vmatprep.subr.mxu0 0.0
  %30 = vmatpush1.msra.mxu0 %v17
  %31 = vmatprep.subr.mxu0 0.0
  %32 = vmatpush1.msra.mxu0 %v18
  %33 = vmatprep.subr.mxu0 0.0
  %34 = vmatpush1.msra.mxu0 %v19
  %35 = vmatprep.subr.mxu0 0.0
  %36 = vmatpush1.msra.mxu0 %v20
  %37 = vmatprep.subr.mxu0 0.0
  %38 = vmatpush1.msra.mxu0 0.0
  %39 = vmatprep.subr.mxu0 0.0
  %40 = vmatpush1.msra.mxu0 0.0
  %41 = vmatprep.subr.mxu0 0.0
  %42 = vmatpush1.msra.mxu0 0.0
  %43 = vmatprep.subr.mxu0 0.0
  %44 = vmatpush1.msra.mxu0 0.0
  %45 = vmatprep.subr.mxu0 0.0
  %46 = vmatpush1.msra.mxu0 0.0
  %47 = vmatprep.subr.mxu0 0.0
  %48 = vmatpush1.msra.mxu0 0.0
  %49 = vmatprep.subr.mxu0 0.0
  %50 = vmatpush1.msra.mxu0 0.0
  %51 = vmatprep.subr.mxu0 0.0
  %52 = vmatpush1.msra.mxu0 0.0
  %53 = vmatprep.subr.mxu0 0.0
  %54 = vmatpush1.msra.mxu0 0.0
  %55 = vmatprep.subr.mxu0 0.0
  %56 = vmatpush1.msra.mxu0 0.0
  %57 = vmatprep.subr.mxu0 0.0
  %58 = vmatpush1.msra.mxu0 0.0
  %59 = vmatprep.subr.mxu0 0.0
  %60 = vmatpush1.msra.mxu0 0.0
  %61 = vmatprep.subr.mxu0 0.0
  %62 = vmatpush1.msra.mxu0 0.0
  %63 = vmatprep.subr.mxu0 0.0
  %64 = vmatpush1.msra.mxu0 0.0
  %65 = vmatprep.subr.mxu0 0.0
  %66 = vmatpush1.msra.mxu0 0.0
  %67 = vmatprep.subr.mxu0 0.0
  %68 = vmatpush1.msra.mxu0 0.0
  %69 = vmatprep.subr.mxu0 0.0
  %70 = vmatpush1.msra.mxu0 0.0
  %71 = vmatprep.subr.mxu0 0.0
  %72 = vmatpush1.msra.mxu0 0.0
  %73 = vmatprep.subr.mxu0 0.0
  %74 = vmatpush1.msra.mxu0 0.0
  %75 = vmatprep.subr.mxu0 0.0
  %76 = vmatpush1.msra.mxu0 0.0
  %77 = vmatprep.subr.mxu0 0.0
  %78 = vmatpush1.msra.mxu0 0.0
  %79 = vmatprep.subr.mxu0 0.0
  %80 = vmatpush1.msra.mxu0 0.0
  %81 = vmatprep.subr.mxu0 0.0
  %82 = vmatpush1.msra.mxu0 0.0
  %83 = vmatprep.subr.mxu0 0.0
  %84 = vmatpush1.msra.mxu0 0.0
  %85 = vmatprep.subr.mxu0 0.0
  %86 = vmatpush1.msra.mxu0 0.0
  %87 = vmatprep.subr.mxu0 0.0
  %88 = vmatpush1.msra.mxu0 0.0
  %89 = vmatprep.subr.mxu0 0.0
  %90 = vmatpush1.msra.mxu0 0.0
  %91 = vmatprep.subr.mxu0 0.0
  %92 = vmatpush1.msra.mxu0 0.0
  %93 = vmatprep.mubr.f32.mxu0 0.0
  %94 = vmatmul.mubr.f32.gmra.mrb[0].mxu0 %v27
  %v95 = vpop.f32.mrb[0].mxu0
  %v96 = vadd.f32 %v24, %v95
  %v97 = vpop.f32.mrb[0].mxu0
  %98 = vdwg.mxu0
  %v99 = vmax.f32 %v96, 0.0
  %v100 = vsel %vm25, %v99, 0.0
  %v101 = vrot.slane %v100, 4
  %v102 = vadd.f32 %v100, %v101
  %v103 = vrot.slane %v102, 2
  %v104 = vadd.f32 %v102, %v103
  %v105 = vrot.slane %v104, 1
  %v106 = vadd.f32 %v104, %v105
  %v107 = vmul.f32 %v106, 0.125
  %v108 = vmul.f32 %v99, %v99
  %v109 = vsel %vm25, %v108, 0.0
  %v110 = vrot.slane %v109, 4
  %v111 = vadd.f32 %v109, %v110
  %v112 = vrot.slane %v111, 2
  %v113 = vadd.f32 %v111, %v112
  %v114 = vrot.slane %v113, 1
  %v115 = vadd.f32 %v113, %v114
  %v116 = vmul.f32 %v115, 0.125
  %v117 = vmul.f32 %v107, %v107
  %v118 = vsub.f32 %v116, %v117
  %v119 = vadd.f32 %v118, 1e-05
  %v120 = vrsqrt.pop %v119
  %v121 = vmul.f32 %v14, %v120
  %v122 = vmul.f32 %v107, %v121
  %v124 = vrot.slane %v122, 3
  %v126 = vsub.f32 %v15, %v124
  %v127 = vlaneseq
  %v128 = vshrl.u32 %v127, 7
  %v129 = vsub.s32 6, %v128
  %v130 = vrot.slane %v121, %v129
  %v131 = vmul.f32 %v99, %v130
  %v132 = vlaneseq
  %v133 = vshrl.u32 %v132, 7
  %v134 = vsub.s32 3, %v133
  %v135 = vrot.slane %v126, %v134
  %v136 = vadd.f32 %v131, %v135
  %s137 = scalar_lea.vmem %s1, 32
  %v138 = vld [vmem:[%s137] sm:$0xff]
  %v139 = vld [vmem:[%s137 + $0x8] sm:$0xff]
  %v140 = vld [vmem:[%s137 + $0x10] sm:$0xff]
  %v141 = vld [vmem:[%s137 + $0x18] sm:$0xff]
  %v142 = vlaneseq
  %v143 = vshrl.u32 %v142, 7
  %v144 = vsub.s32 1, %v143
  %v145 = vrot.slane %v14, %v144
  %v147 = vsel %vm25, %v136, 0
  %149 = vmatprep.subr.mxu0 0.0
  %150 = vmatpush1.msra.mxu0 %v138
  %151 = vmatprep.subr.mxu0 0.0
  %152 = vmatpush1.msra.mxu0 %v139
  %153 = vmatprep.subr.mxu0 0.0
  %154 = vmatpush1.msra.mxu0 %v140
  %155 = vmatprep.subr.mxu0 0.0
  %156 = vmatpush1.msra.mxu0 %v141
  %157 = vmatprep.subr.mxu0 0.0
  %158 = vmatpush1.msra.mxu0 0.0
  %159 = vmatprep.subr.mxu0 0.0
  %160 = vmatpush1.msra.mxu0 0.0
  %161 = vmatprep.subr.mxu0 0.0
  %162 = vmatpush1.msra.mxu0 0.0
  %163 = vmatprep.subr.mxu0 0.0
  %164 = vmatpush1.msra.mxu0 0.0
  %165 = vmatprep.subr.mxu0 0.0
  %166 = vmatpush1.msra.mxu0 0.0
  %167 = vmatprep.subr.mxu0 0.0
  %168 = vmatpush1.msra.mxu0 0.0
  %169 = vmatprep.subr.mxu0 0.0
  %170 = vmatpush1.msra.mxu0 0.0
  %171 = vmatprep.subr.mxu0 0.0
  %172 = vmatpush1.msra.mxu0 0.0
  %173 = vmatprep.subr.mxu0 0.0
  %174 = vmatpush1.msra.mxu0 0.0
  %175 = vmatprep.subr.mxu0 0.0
  %176 = vmatpush1.msra.mxu0 0.0
  %177 = vmatprep.subr.mxu0 0.0
  %178 = vmatpush1.msra.mxu0 0.0
  %179 = vmatprep.subr.mxu0 0.0
  %180 = vmatpush1.msra.mxu0 0.0
  %181 = vmatprep.subr.mxu0 0.0
  %182 = vmatpush1.msra.mxu0 0.0
  %183 = vmatprep.subr.mxu0 0.0
  %184 = vmatpush1.msra.mxu0 0.0
  %185 = vmatprep.subr.mxu0 0.0
  %186 = vmatpush1.msra.mxu0 0.0
  %187 = vmatprep.subr.mxu0 0.0
  %188 = vmatpush1.msra.mxu0 0.0
  %189 = vmatprep.subr.mxu0 0.0
  %190 = vmatpush1.msra.mxu0 0.0
  %191 = vmatprep.subr.mxu0 0.0
  %192 = vmatpush1.msra.mxu0 0.0
  %193 = vmatprep.subr.mxu0 0.0
  %194 = vmatpush1.msra.mxu0 0.0
  %195 = vmatprep.subr.mxu0 0.0
  %196 = vmatpush1.msra.mxu0 0.0
  %197 = vmatprep.subr.mxu0 0.0
  %198 = vmatpush1.msra.mxu0 0.0
  %199 = vmatprep.subr.mxu0 0.0
  %200 = vmatpush1.msra.mxu0 0.0
  %201 = vmatprep.subr.mxu0 0.0
  %202 = vmatpush1.msra.mxu0 0.0
  %203 = vmatprep.subr.mxu0 0.0
  %204 = vmatpush1.msra.mxu0 0.0
  %205 = vmatprep.subr.mxu0 0.0
  %206 = vmatpush1.msra.mxu0 0.0
  %207 = vmatprep.subr.mxu0 0.0
  %208 = vmatpush1.msra.mxu0 0.0
  %209 = vmatprep.subr.mxu0 0.0
  %210 = vmatpush1.msra.mxu0 0.0
  %211 = vmatprep.subr.mxu0 0.0
  %212 = vmatpush1.msra.mxu0 0.0
  %213 = vmatprep.mubr.f32.mxu0 0.0
  %214 = vmatmul.mubr.f32.gmra.mrb[0].mxu0 %v147
  %v215 = vpop.f32.mrb[0].mxu0
  %v216 = vadd.f32 %v145, %v215
  %v217 = vpop.f32.mrb[0].mxu0
  %218 = vdwg.mxu0
  %v219 = vmax.f32 %v216, 0.0
  %v220 = vsel %vm25, %v219, 0.0
  %v221 = vrot.slane %v220, 4
  %v222 = vadd.f32 %v220, %v221
  %v223 = vrot.slane %v222, 2
  %v224 = vadd.f32 %v222, %v223
  %v225 = vrot.slane %v224, 1
  %v226 = vadd.f32 %v224, %v225
  %v227 = vmul.f32 %v226, 0.125
  %v228 = vmul.f32 %v219, %v219
  %v229 = vsel %vm25, %v228, 0.0
  %v230 = vrot.slane %v229, 4
  %v231 = vadd.f32 %v229, %v230
  %v232 = vrot.slane %v231, 2
  %v233 = vadd.f32 %v231, %v232
  %v234 = vrot.slane %v233, 1
  %v235 = vadd.f32 %v233, %v234
  %v236 = vmul.f32 %v235, 0.125
  %v237 = vmul.f32 %v227, %v227
  %v238 = vsub.f32 %v236, %v237
  %v239 = vadd.f32 %v238, 1e-05
  %v240 = vrsqrt.pop %v239
  %v241 = vmul.f32 %v14, %v240
  %v242 = vmul.f32 %v227, %v241
  %v244 = vrot.slane %v242, 3
  %v246 = vsub.f32 %v15, %v244
  %v247 = vlaneseq
  %v248 = vshrl.u32 %v247, 7
  %v249 = vsub.s32 7, %v248
  %v250 = vrot.slane %v241, %v249
  %v251 = vmul.f32 %v219, %v250
  %v252 = vlaneseq
  %v253 = vshrl.u32 %v252, 7
  %v254 = vsub.s32 4, %v253
  %v255 = vrot.slane %v246, %v254
  %v256 = vadd.f32 %v251, %v255
  %s257 = scalar_lea.vmem %s1, 64
  %v258 = vld [vmem:[%s257] sm:$0xff]
  %v259 = vld [vmem:[%s257 + $0x8] sm:$0xff]
  %v260 = vld [vmem:[%s257 + $0x10] sm:$0xff]
  %v261 = vld [vmem:[%s257 + $0x18] sm:$0xff]
  %v262 = vlaneseq
  %v263 = vshrl.u32 %v262, 7
  %v264 = vsub.s32 2, %v263
  %v265 = vrot.slane %v14, %v264
  %v267 = vsel %vm25, %v256, 0
  %269 = vmatprep.subr.mxu0 0.0
  %270 = vmatpush1.msra.mxu0 %v258
  %271 = vmatprep.subr.mxu0 0.0
  %272 = vmatpush1.msra.mxu0 %v259
  %273 = vmatprep.subr.mxu0 0.0
  %274 = vmatpush1.msra.mxu0 %v260
  %275 = vmatprep.subr.mxu0 0.0
  %276 = vmatpush1.msra.mxu0 %v261
  %277 = vmatprep.subr.mxu0 0.0
  %278 = vmatpush1.msra.mxu0 0.0
  %279 = vmatprep.subr.mxu0 0.0
  %280 = vmatpush1.msra.mxu0 0.0
  %281 = vmatprep.subr.mxu0 0.0
  %282 = vmatpush1.msra.mxu0 0.0
  %283 = vmatprep.subr.mxu0 0.0
  %284 = vmatpush1.msra.mxu0 0.0
  %285 = vmatprep.subr.mxu0 0.0
  %286 = vmatpush1.msra.mxu0 0.0
  %287 = vmatprep.subr.mxu0 0.0
  %288 = vmatpush1.msra.mxu0 0.0
  %289 = vmatprep.subr.mxu0 0.0
  %290 = vmatpush1.msra.mxu0 0.0
  %291 = vmatprep.subr.mxu0 0.0
  %292 = vmatpush1.msra.mxu0 0.0
  %293 = vmatprep.subr.mxu0 0.0
  %294 = vmatpush1.msra.mxu0 0.0
  %295 = vmatprep.subr.mxu0 0.0
  %296 = vmatpush1.msra.mxu0 0.0
  %297 = vmatprep.subr.mxu0 0.0
  %298 = vmatpush1.msra.mxu0 0.0
  %299 = vmatprep.subr.mxu0 0.0
  %300 = vmatpush1.msra.mxu0 0.0
  %301 = vmatprep.subr.mxu0 0.0
  %302 = vmatpush1.msra.mxu0 0.0
  %303 = vmatprep.subr.mxu0 0.0
  %304 = vmatpush1.msra.mxu0 0.0
  %305 = vmatprep.subr.mxu0 0.0
  %306 = vmatpush1.msra.mxu0 0.0
  %307 = vmatprep.subr.mxu0 0.0
  %308 = vmatpush1.msra.mxu0 0.0
  %309 = vmatprep.subr.mxu0 0.0
  %310 = vmatpush1.msra.mxu0 0.0
  %311 = vmatprep.subr.mxu0 0.0
  %312 = vmatpush1.msra.mxu0 0.0
  %313 = vmatprep.subr.mxu0 0.0
  %314 = vmatpush1.msra.mxu0 0.0
  %315 = vmatprep.subr.mxu0 0.0
  %316 = vmatpush1.msra.mxu0 0.0
  %317 = vmatprep.subr.mxu0 0.0
  %318 = vmatpush1.msra.mxu0 0.0
  %319 = vmatprep.subr.mxu0 0.0
  %320 = vmatpush1.msra.mxu0 0.0
  %321 = vmatprep.subr.mxu0 0.0
  %322 = vmatpush1.msra.mxu0 0.0
  %323 = vmatprep.subr.mxu0 0.0
  %324 = vmatpush1.msra.mxu0 0.0
  %325 = vmatprep.subr.mxu0 0.0
  %326 = vmatpush1.msra.mxu0 0.0
  %327 = vmatprep.subr.mxu0 0.0
  %328 = vmatpush1.msra.mxu0 0.0
  %329 = vmatprep.subr.mxu0 0.0
  %330 = vmatpush1.msra.mxu0 0.0
  %331 = vmatprep.subr.mxu0 0.0
  %332 = vmatpush1.msra.mxu0 0.0
  %333 = vmatprep.mubr.f32.mxu0 0.0
  %334 = vmatmul.mubr.f32.gmra.mrb[0].mxu0 %v267
  %v335 = vpop.f32.mrb[0].mxu0
  %v336 = vadd.f32 %v265, %v335
  %v337 = vpop.f32.mrb[0].mxu0
  %338 = vdwg.mxu0
  %v339 = vmax.f32 %v336, 0.0
  %v340 = vsel %vm25, %v339, 0.0
  %v341 = vrot.slane %v340, 4
  %v342 = vadd.f32 %v340, %v341
  %v343 = vrot.slane %v342, 2
  %v344 = vadd.f32 %v342, %v343
  %v345 = vrot.slane %v344, 1
  %v346 = vadd.f32 %v344, %v345
  %v347 = vmul.f32 %v346, 0.125
  %v348 = vmul.f32 %v339, %v339
  %v349 = vsel %vm25, %v348, 0.0
  %v350 = vrot.slane %v349, 4
  %v351 = vadd.f32 %v349, %v350
  %v352 = vrot.slane %v351, 2
  %v353 = vadd.f32 %v351, %v352
  %v354 = vrot.slane %v353, 1
  %v355 = vadd.f32 %v353, %v354
  %v356 = vmul.f32 %v355, 0.125
  %v357 = vmul.f32 %v347, %v347
  %v358 = vsub.f32 %v356, %v357
  %v359 = vadd.f32 %v358, 1e-05
  %v360 = vrsqrt.pop %v359
  %v361 = vmul.f32 %v15, %v360
  %v362 = vmul.f32 %v347, %v361
  %v364 = vrot.slane %v362, 3
  %v366 = vsub.f32 %v15, %v364
  %v367 = vlaneseq
  %v368 = vshrl.u32 %v367, 7
  %v369 = vsub.s32 0, %v368
  %v370 = vrot.slane %v361, %v369
  %v371 = vmul.f32 %v339, %v370
  %v372 = vlaneseq
  %v373 = vshrl.u32 %v372, 7
  %v374 = vsub.s32 5, %v373
  %v375 = vrot.slane %v366, %v374
  %v376 = vadd.f32 %v371, %v375
  %s377 = scalar_lea.vmem %s1, 96
  %v378 = vld [vmem:[%s377] sm:$0xff]
  %v379 = vld [vmem:[%s377 + $0x8] sm:$0xff]
  %v380 = vld [vmem:[%s377 + $0x10] sm:$0xff]
  %v381 = vld [vmem:[%s377 + $0x18] sm:$0xff]
  %v382 = vlaneseq
  %v383 = vshrl.u32 %v382, 7
  %v384 = vsub.s32 3, %v383
  %v385 = vrot.slane %v14, %v384
  %v387 = vsel %vm25, %v376, 0
  %389 = vmatprep.subr.mxu0 0.0
  %390 = vmatpush1.msra.mxu0 %v378
  %391 = vmatprep.subr.mxu0 0.0
  %392 = vmatpush1.msra.mxu0 %v379
  %393 = vmatprep.subr.mxu0 0.0
  %394 = vmatpush1.msra.mxu0 %v380
  %395 = vmatprep.subr.mxu0 0.0
  %396 = vmatpush1.msra.mxu0 %v381
  %397 = vmatprep.subr.mxu0 0.0
  %398 = vmatpush1.msra.mxu0 0.0
  %399 = vmatprep.subr.mxu0 0.0
  %400 = vmatpush1.msra.mxu0 0.0
  %401 = vmatprep.subr.mxu0 0.0
  %402 = vmatpush1.msra.mxu0 0.0
  %403 = vmatprep.subr.mxu0 0.0
  %404 = vmatpush1.msra.mxu0 0.0
  %405 = vmatprep.subr.mxu0 0.0
  %406 = vmatpush1.msra.mxu0 0.0
  %407 = vmatprep.subr.mxu0 0.0
  %408 = vmatpush1.msra.mxu0 0.0
  %409 = vmatprep.subr.mxu0 0.0
  %410 = vmatpush1.msra.mxu0 0.0
  %411 = vmatprep.subr.mxu0 0.0
  %412 = vmatpush1.msra.mxu0 0.0
  %413 = vmatprep.subr.mxu0 0.0
  %414 = vmatpush1.msra.mxu0 0.0
  %415 = vmatprep.subr.mxu0 0.0
  %416 = vmatpush1.msra.mxu0 0.0
  %417 = vmatprep.subr.mxu0 0.0
  %418 = vmatpush1.msra.mxu0 0.0
  %419 = vmatprep.subr.mxu0 0.0
  %420 = vmatpush1.msra.mxu0 0.0
  %421 = vmatprep.subr.mxu0 0.0
  %422 = vmatpush1.msra.mxu0 0.0
  %423 = vmatprep.subr.mxu0 0.0
  %424 = vmatpush1.msra.mxu0 0.0
  %425 = vmatprep.subr.mxu0 0.0
  %426 = vmatpush1.msra.mxu0 0.0
  %427 = vmatprep.subr.mxu0 0.0
  %428 = vmatpush1.msra.mxu0 0.0
  %429 = vmatprep.subr.mxu0 0.0
  %430 = vmatpush1.msra.mxu0 0.0
  %431 = vmatprep.subr.mxu0 0.0
  %432 = vmatpush1.msra.mxu0 0.0
  %433 = vmatprep.subr.mxu0 0.0
  %434 = vmatpush1.msra.mxu0 0.0
  %435 = vmatprep.subr.mxu0 0.0
  %436 = vmatpush1.msra.mxu0 0.0
  %437 = vmatprep.subr.mxu0 0.0
  %438 = vmatpush1.msra.mxu0 0.0
  %439 = vmatprep.subr.mxu0 0.0
  %440 = vmatpush1.msra.mxu0 0.0
  %441 = vmatprep.subr.mxu0 0.0
  %442 = vmatpush1.msra.mxu0 0.0
  %443 = vmatprep.subr.mxu0 0.0
  %444 = vmatpush1.msra.mxu0 0.0
  %445 = vmatprep.subr.mxu0 0.0
  %446 = vmatpush1.msra.mxu0 0.0
  %447 = vmatprep.subr.mxu0 0.0
  %448 = vmatpush1.msra.mxu0 0.0
  %449 = vmatprep.subr.mxu0 0.0
  %450 = vmatpush1.msra.mxu0 0.0
  %451 = vmatprep.subr.mxu0 0.0
  %452 = vmatpush1.msra.mxu0 0.0
  %453 = vmatprep.mubr.f32.mxu0 0.0
  %454 = vmatmul.mubr.f32.gmra.mrb[0].mxu0 %v387
  %v455 = vpop.f32.mrb[0].mxu0
  %v456 = vadd.f32 %v385, %v455
  %v457 = vpop.f32.mrb[0].mxu0
  %458 = vdwg.mxu0
  %v459 = vmax.f32 %v456, 0.0
  %v460 = vsel %vm25, %v459, 0.0
  %v461 = vrot.slane %v460, 4
  %v462 = vadd.f32 %v460, %v461
  %v463 = vrot.slane %v462, 2
  %v464 = vadd.f32 %v462, %v463
  %v465 = vrot.slane %v464, 1
  %v466 = vadd.f32 %v464, %v465
  %v467 = vmul.f32 %v466, 0.125
  %v468 = vmul.f32 %v459, %v459
  %v469 = vsel %vm25, %v468, 0.0
  %v470 = vrot.slane %v469, 4
  %v471 = vadd.f32 %v469, %v470
  %v472 = vrot.slane %v471, 2
  %v473 = vadd.f32 %v471, %v472
  %v474 = vrot.slane %v473, 1
  %v475 = vadd.f32 %v473, %v474
  %v476 = vmul.f32 %v475, 0.125
  %v477 = vmul.f32 %v467, %v467
  %v478 = vsub.f32 %v476, %v477
  %v479 = vadd.f32 %v478, 1e-05
  %v480 = vrsqrt.pop %v479
  %v481 = vmul.f32 %v15, %v480
  %v482 = vmul.f32 %v467, %v481
  %v484 = vrot.slane %v482, 3
  %v486 = vsub.f32 %v15, %v484
  %v487 = vlaneseq
  %v488 = vshrl.u32 %v487, 7
  %v489 = vsub.s32 1, %v488
  %v490 = vrot.slane %v481, %v489
  %v491 = vmul.f32 %v459, %v490
  %v492 = vlaneseq
  %v493 = vshrl.u32 %v492, 7
  %v494 = vsub.s32 6, %v493
  %v495 = vrot.slane %v486, %v494
  %v496 = vadd.f32 %v491, %v495
  %s497 = scalar_lea.vmem %s1, 128
  %v498 = vld [vmem:[%s497] sm:$0xff]
  %v499 = vld [vmem:[%s497 + $0x8] sm:$0xff]
  %v500 = vld [vmem:[%s497 + $0x10] sm:$0xff]
  %v501 = vld [vmem:[%s497 + $0x18] sm:$0xff]
  %v502 = vlaneseq
  %v503 = vshrl.u32 %v502, 7
  %v504 = vsub.s32 4, %v503
  %v505 = vrot.slane %v14, %v504
  %v507 = vsel %vm25, %v496, 0
  %509 = vmatprep.subr.mxu0 0.0
  %510 = vmatpush1.msra.mxu0 %v498
  %511 = vmatprep.subr.mxu0 0.0
  %512 = vmatpush1.msra.mxu0 %v499
  %513 = vmatprep.subr.mxu0 0.0
  %514 = vmatpush1.msra.mxu0 %v500
  %515 = vmatprep.subr.mxu0 0.0
  %516 = vmatpush1.msra.mxu0 %v501
  %517 = vmatprep.subr.mxu0 0.0
  %518 = vmatpush1.msra.mxu0 0.0
  %519 = vmatprep.subr.mxu0 0.0
  %520 = vmatpush1.msra.mxu0 0.0
  %521 = vmatprep.subr.mxu0 0.0
  %522 = vmatpush1.msra.mxu0 0.0
  %523 = vmatprep.subr.mxu0 0.0
  %524 = vmatpush1.msra.mxu0 0.0
  %525 = vmatprep.subr.mxu0 0.0
  %526 = vmatpush1.msra.mxu0 0.0
  %527 = vmatprep.subr.mxu0 0.0
  %528 = vmatpush1.msra.mxu0 0.0
  %529 = vmatprep.subr.mxu0 0.0
  %530 = vmatpush1.msra.mxu0 0.0
  %531 = vmatprep.subr.mxu0 0.0
  %532 = vmatpush1.msra.mxu0 0.0
  %533 = vmatprep.subr.mxu0 0.0
  %534 = vmatpush1.msra.mxu0 0.0
  %535 = vmatprep.subr.mxu0 0.0
  %536 = vmatpush1.msra.mxu0 0.0
  %537 = vmatprep.subr.mxu0 0.0
  %538 = vmatpush1.msra.mxu0 0.0
  %539 = vmatprep.subr.mxu0 0.0
  %540 = vmatpush1.msra.mxu0 0.0
  %541 = vmatprep.subr.mxu0 0.0
  %542 = vmatpush1.msra.mxu0 0.0
  %543 = vmatprep.subr.mxu0 0.0
  %544 = vmatpush1.msra.mxu0 0.0
  %545 = vmatprep.subr.mxu0 0.0
  %546 = vmatpush1.msra.mxu0 0.0
  %547 = vmatprep.subr.mxu0 0.0
  %548 = vmatpush1.msra.mxu0 0.0
  %549 = vmatprep.subr.mxu0 0.0
  %550 = vmatpush1.msra.mxu0 0.0
  %551 = vmatprep.subr.mxu0 0.0
  %552 = vmatpush1.msra.mxu0 0.0
  %553 = vmatprep.subr.mxu0 0.0
  %554 = vmatpush1.msra.mxu0 0.0
  %555 = vmatprep.subr.mxu0 0.0
  %556 = vmatpush1.msra.mxu0 0.0
  %557 = vmatprep.subr.mxu0 0.0
  %558 = vmatpush1.msra.mxu0 0.0
  %559 = vmatprep.subr.mxu0 0.0
  %560 = vmatpush1.msra.mxu0 0.0
  %561 = vmatprep.subr.mxu0 0.0
  %562 = vmatpush1.msra.mxu0 0.0
  %563 = vmatprep.subr.mxu0 0.0
  %564 = vmatpush1.msra.mxu0 0.0
  %565 = vmatprep.subr.mxu0 0.0
  %566 = vmatpush1.msra.mxu0 0.0
  %567 = vmatprep.subr.mxu0 0.0
  %568 = vmatpush1.msra.mxu0 0.0
  %569 = vmatprep.subr.mxu0 0.0
  %570 = vmatpush1.msra.mxu0 0.0
  %571 = vmatprep.subr.mxu0 0.0
  %572 = vmatpush1.msra.mxu0 0.0
  %573 = vmatprep.mubr.f32.mxu0 0.0
  %574 = vmatmul.mubr.f32.gmra.mrb[0].mxu0 %v507
  %v575 = vpop.f32.mrb[0].mxu0
  %v576 = vadd.f32 %v505, %v575
  %v577 = vpop.f32.mrb[0].mxu0
  %578 = vdwg.mxu0
  %v579 = vmax.f32 %v576, 0.0
  %v580 = vsel %vm25, %v579, 0.0
  %v581 = vrot.slane %v580, 4
  %v582 = vadd.f32 %v580, %v581
  %v583 = vrot.slane %v582, 2
  %v584 = vadd.f32 %v582, %v583
  %v585 = vrot.slane %v584, 1
  %v586 = vadd.f32 %v584, %v585
  %v587 = vmul.f32 %v586, 0.125
  %v588 = vmul.f32 %v579, %v579
  %v589 = vsel %vm25, %v588, 0.0
  %v590 = vrot.slane %v589, 4
  %v591 = vadd.f32 %v589, %v590
  %v592 = vrot.slane %v591, 2
  %v593 = vadd.f32 %v591, %v592
  %v594 = vrot.slane %v593, 1
  %v595 = vadd.f32 %v593, %v594
  %v596 = vmul.f32 %v595, 0.125
  %v597 = vmul.f32 %v587, %v587
  %v598 = vsub.f32 %v596, %v597
  %v599 = vadd.f32 %v598, 1e-05
  %v600 = vrsqrt.pop %v599
  %v601 = vmul.f32 %v15, %v600
  %v602 = vmul.f32 %v587, %v601
  %v604 = vrot.slane %v602, 3
  %v606 = vsub.f32 %v15, %v604
  %v607 = vlaneseq
  %v608 = vshrl.u32 %v607, 7
  %v609 = vsub.s32 2, %v608
  %v610 = vrot.slane %v601, %v609
  %v611 = vmul.f32 %v579, %v610
  %v612 = vlaneseq
  %v613 = vshrl.u32 %v612, 7
  %v614 = vsub.s32 7, %v613
  %v615 = vrot.slane %v606, %v614
  %v616 = vadd.f32 %v611, %v615
  %s617 = scalar_lea.vmem %s1, 160
  %v618 = vld [vmem:[%s617] sm:$0xff]
  %v619 = vld [vmem:[%s617 + $0x8] sm:$0xff]
  %v620 = vld [vmem:[%s617 + $0x10] sm:$0xff]
  %v621 = vld [vmem:[%s617 + $0x18] sm:$0xff]
  %v622 = vlaneseq
  %v623 = vshrl.u32 %v622, 7
  %v624 = vsub.s32 5, %v623
  %v625 = vrot.slane %v14, %v624
  %v627 = vsel %vm25, %v616, 0
  %629 = vmatprep.subr.mxu0 0.0
  %630 = vmatpush1.msra.mxu0 %v618
  %631 = vmatprep.subr.mxu0 0.0
  %632 = vmatpush1.msra.mxu0 %v619
  %633 = vmatprep.subr.mxu0 0.0
  %634 = vmatpush1.msra.mxu0 %v620
  %635 = vmatprep.subr.mxu0 0.0
  %636 = vmatpush1.msra.mxu0 %v621
  %637 = vmatprep.subr.mxu0 0.0
  %638 = vmatpush1.msra.mxu0 0.0
  %639 = vmatprep.subr.mxu0 0.0
  %640 = vmatpush1.msra.mxu0 0.0
  %641 = vmatprep.subr.mxu0 0.0
  %642 = vmatpush1.msra.mxu0 0.0
  %643 = vmatprep.subr.mxu0 0.0
  %644 = vmatpush1.msra.mxu0 0.0
  %645 = vmatprep.subr.mxu0 0.0
  %646 = vmatpush1.msra.mxu0 0.0
  %647 = vmatprep.subr.mxu0 0.0
  %648 = vmatpush1.msra.mxu0 0.0
  %649 = vmatprep.subr.mxu0 0.0
  %650 = vmatpush1.msra.mxu0 0.0
  %651 = vmatprep.subr.mxu0 0.0
  %652 = vmatpush1.msra.mxu0 0.0
  %653 = vmatprep.subr.mxu0 0.0
  %654 = vmatpush1.msra.mxu0 0.0
  %655 = vmatprep.subr.mxu0 0.0
  %656 = vmatpush1.msra.mxu0 0.0
  %657 = vmatprep.subr.mxu0 0.0
  %658 = vmatpush1.msra.mxu0 0.0
  %659 = vmatprep.subr.mxu0 0.0
  %660 = vmatpush1.msra.mxu0 0.0
  %661 = vmatprep.subr.mxu0 0.0
  %662 = vmatpush1.msra.mxu0 0.0
  %663 = vmatprep.subr.mxu0 0.0
  %664 = vmatpush1.msra.mxu0 0.0
  %665 = vmatprep.subr.mxu0 0.0
  %666 = vmatpush1.msra.mxu0 0.0
  %667 = vmatprep.subr.mxu0 0.0
  %668 = vmatpush1.msra.mxu0 0.0
  %669 = vmatprep.subr.mxu0 0.0
  %670 = vmatpush1.msra.mxu0 0.0
  %671 = vmatprep.subr.mxu0 0.0
  %672 = vmatpush1.msra.mxu0 0.0
  %673 = vmatprep.subr.mxu0 0.0
  %674 = vmatpush1.msra.mxu0 0.0
  %675 = vmatprep.subr.mxu0 0.0
  %676 = vmatpush1.msra.mxu0 0.0
  %677 = vmatprep.subr.mxu0 0.0
  %678 = vmatpush1.msra.mxu0 0.0
  %679 = vmatprep.subr.mxu0 0.0
  %680 = vmatpush1.msra.mxu0 0.0
  %681 = vmatprep.subr.mxu0 0.0
  %682 = vmatpush1.msra.mxu0 0.0
  %683 = vmatprep.subr.mxu0 0.0
  %684 = vmatpush1.msra.mxu0 0.0
  %685 = vmatprep.subr.mxu0 0.0
  %686 = vmatpush1.msra.mxu0 0.0
  %687 = vmatprep.subr.mxu0 0.0
  %688 = vmatpush1.msra.mxu0 0.0
  %689 = vmatprep.subr.mxu0 0.0
  %690 = vmatpush1.msra.mxu0 0.0
  %691 = vmatprep.subr.mxu0 0.0
  %692 = vmatpush1.msra.mxu0 0.0
  %693 = vmatprep.mubr.f32.mxu0 0.0
  %694 = vmatmul.mubr.f32.gmra.mrb[0].mxu0 %v627
  %v695 = vpop.f32.mrb[0].mxu0
  %v696 = vadd.f32 %v625, %v695
  %v697 = vpop.f32.mrb[0].mxu0
  %698 = vdwg.mxu0
  %699 = vst.msk [vmem:[%s3] sm:$0xff] %vm25, %v696
  // Predicated region
  $region14: #{mlp_forward.1} parent=0 // pred_check
    _
  $region15: #{mlp_forward.1} parent=0 // pred_check_branch
    %701 = sbr.rel (0) target = $region17
  $region16: #{mlp_forward.1} parent=0 // pred_region
    _
  $region17: #{mlp_forward.1} parent=0 // pred_fallthru
    _
  // Predicated region
  $region18: #{mlp_forward.1} parent=0 // pred_check
    _
  $region19: #{mlp_forward.1} parent=0 // pred_check_branch
    %703 = sbr.rel (0) target = $region21
  $region20: #{mlp_forward.1} parent=0 // pred_region
    _
  $region21: #{mlp_forward.1} parent=0 // pred_fallthru
    _

</llo_original>
